<compile_context>
chip_gen: v5e
topology: v5e:2x2
jax: 0.10.0
libtpu: 0.0.40
codegen_flags: <defaults>
</compile_context>

<pallas_src>
import jax
import jax.numpy as jnp
from jax.experimental import pallas as pl
from jax.experimental.pallas import tpu as pltpu


MASK_VALUE = -1e30   # score assigned to non-edges
M_INIT = -1e20       # finite running-max floor: exp(MASK_VALUE - m) underflows to 0
                     # even when an entire source tile is masked for some dst row.


def gat_kernel(edst_ref, esrc_ref, z_ref, adj_ref, out_ref, m_ref, l_ref, acc_ref):
    k = pl.program_id(1)                       # source-tile index (reduction axis)

    @pl.when(k == 0)
    def _init():
        m_ref[...] = jnp.full_like(m_ref, M_INIT)
        l_ref[...] = jnp.zeros_like(l_ref)
        acc_ref[...] = jnp.zeros_like(acc_ref)

    # Attention scores for this (dst-tile, src-tile) block: outer sum of the two
    # precomputed projections, leaky_relu (PyTorch default slope 0.01), edge mask.
    scores = edst_ref[...] + esrc_ref[...]                      # [T, Ts] f32
    scores = jnp.where(scores > 0, scores, 0.01 * scores)
    mask = adj_ref[...] != 0                                    # int8 compare, no f32 cast
    scores = jnp.where(mask, scores, MASK_VALUE)

    # Online softmax update (flash-attention style).
    m_prev = m_ref[...]                                         # [T, 1]
    m_new = jnp.maximum(m_prev, jnp.max(scores, axis=-1, keepdims=True))
    corr = jnp.exp(m_prev - m_new)                              # rescale previous partials
    p = jnp.exp(scores - m_new)                                 # masked entries -> exact 0
    l_ref[...] = corr * l_ref[...] + jnp.sum(p, axis=-1, keepdims=True)
    acc_ref[...] = corr * acc_ref[...] + jnp.dot(
        p.astype(jnp.bfloat16), z_ref[...], preferred_element_type=jnp.float32)
    m_ref[...] = m_new

    @pl.when(k == pl.num_programs(1) - 1)
    def _finalize():
        denom = l_ref[...]                                      # [T, 1]
        inv = pl.reciprocal(denom, approx=True)
        inv = inv * (2.0 - denom * inv)                         # one Newton step
        out_ref[...] = (acc_ref[...] * inv).astype(out_ref.dtype)


def gat_forward(h, w_fc_t, a_src, a_dst, adj_i8, *, tile_dst=None, tile_src=None):
    """h:[N,in]  w_fc_t:[in,D]  a_src,a_dst:[D,1]  adj_i8:int8 [N(dst), N(src)]."""
    N, _ = h.shape
    D = w_fc_t.shape[1]
    hp = jax.lax.Precision.HIGHEST

    # Hoisted projections: done once in XLA, not per grid step inside the kernel.
    z = jnp.dot(h.astype(jnp.float32), w_fc_t.astype(jnp.float32), precision=hp)   # [N, D]
    e_src = jnp.dot(z, a_src.astype(jnp.float32), precision=hp).T                  # [1, N]
    e_dst = jnp.dot(z, a_dst.astype(jnp.float32), precision=hp)                    # [N, 1]
    z_bf16 = z.astype(jnp.bfloat16)                                                # MXU operand

    if tile_dst is None:
        tile_dst = min(N, 256)
    if tile_src is None:
        tile_src = min(N, 512)
    assert N % tile_dst == 0 and N % tile_src == 0
    assert tile_dst == N or tile_dst % 32 == 0     # int8 adjacency sublane packing
    assert tile_src == N or tile_src % 128 == 0    # lane dimension
    grid = (N // tile_dst, N // tile_src)

    # Derived VMEM budget (double-buffered streamed blocks + scratch + score intermediates),
    # capped at 48 MiB so it stays portable to v7x's 64 MiB physical VMEM.
    vmem_bytes = (
        2 * tile_dst * tile_src * 1            # adj tile, int8
        + 2 * tile_src * D * 2                 # z tile, bf16
        + 2 * (tile_src + tile_dst) * 4        # e_src / e_dst tiles
        + 2 * tile_dst * D * 4                 # output tile
        + (2 * tile_dst + tile_dst * D) * 4    # m / l / acc scratch
        + 4 * tile_dst * tile_src * 4          # score / exp intermediates
    )
    vmem_limit = int(min(48 * 1024 * 1024, max(16 * 1024 * 1024, 2 * vmem_bytes)))

    return pl.pallas_call(
        gat_kernel,
        out_shape=jax.ShapeDtypeStruct((N, D), jnp.float32),
        grid=grid,
        in_specs=[
            pl.BlockSpec((tile_dst, 1), lambda i, k: (i, 0)),         # e_dst column (dst rows)
            pl.BlockSpec((1, tile_src), lambda i, k: (0, k)),         # e_src row   (src cols)
            pl.BlockSpec((tile_src, D), lambda i, k: (k, 0)),         # z source rows, bf16
            pl.BlockSpec((tile_dst, tile_src), lambda i, k: (i, k)),  # adjacency tile, int8
        ],
        out_specs=pl.BlockSpec((tile_dst, D), lambda i, k: (i, 0)),   # resident across k
        scratch_shapes=[
            pltpu.VMEM((tile_dst, 1), jnp.float32),   # running row max
            pltpu.VMEM((tile_dst, 1), jnp.float32),   # running denominator
            pltpu.VMEM((tile_dst, D), jnp.float32),   # running weighted sum
        ],
        compiler_params=pltpu.CompilerParams(
            dimension_semantics=("parallel", "arbitrary"),
            vmem_limit_bytes=vmem_limit,
        ),
    )(e_dst, e_src, z_bf16, adj_i8)


def xavier_normal(key, shape, gain):
    fan_out, fan_in = shape
    std = gain * jnp.sqrt(2.0 / (fan_in + fan_out))
    return std * jax.random.normal(key, shape, dtype=jnp.float32)


def reference(h, w_fc_t, a_src, a_dst, adj_f32):
    hp = jax.lax.Precision.HIGHEST
    z = jnp.dot(h, w_fc_t, precision=hp)
    e = jnp.dot(z, a_dst, precision=hp) + jnp.dot(z, a_src, precision=hp).T
    e = jnp.where(e > 0, e, 0.01 * e)
    e = jnp.where(adj_f32 > 0, e, -1e30)
    p = jnp.exp(e - e.max(-1, keepdims=True)) * adj_f32
    alpha = p / p.sum(-1, keepdims=True)
    return jnp.dot(alpha, z, precision=hp)


if __name__ == "__main__":
    # Small graph, but large enough to exercise both grid axes:
    # 4 dst tiles of 64 rows x 2 src tiles of 128 cols.
    N, in_dim, out_dim = 256, 16, 8
    key = jax.random.PRNGKey(0)
    k_h, k_fc, k_attn, k_adj = jax.random.split(key, 4)

    # node features
    h = jax.random.normal(k_h, (N, in_dim), dtype=jnp.float32)

    # fc.weight: [out_dim, in_dim]  (xavier_normal, gain = calculate_gain('relu') = sqrt(2))
    gain = jnp.sqrt(2.0)
    w_fc = xavier_normal(k_fc, (out_dim, in_dim), gain)
    w_fc_t = w_fc.T                                     # [in_dim, out_dim], z = h @ W^T

    # attn_fc.weight: [1, 2*out_dim] -> src / dst halves
    w_attn = xavier_normal(k_attn, (1, 2 * out_dim), gain)
    a_src = w_attn[0, :out_dim].reshape(out_dim, 1)
    a_dst = w_attn[0, out_dim:].reshape(out_dim, 1)

    # synthetic graph: random edges + self-loops, adj[dst, src]; stored as int8
    adj_f32 = (jax.random.uniform(k_adj, (N, N)) < 0.1).astype(jnp.float32)
    adj_f32 = jnp.maximum(adj_f32, jnp.eye(N, dtype=jnp.float32))
    adj_i8 = adj_f32.astype(jnp.int8)

    out = gat_forward(h, w_fc_t, a_src, a_dst, adj_i8, tile_dst=64, tile_src=128)
    jax.block_until_ready(out)

    ref = reference(h, w_fc_t, a_src, a_dst, adj_f32)
    # Tolerance accounts for bf16 MXU operands (p, z) in the aggregation matmul.
    assert not jnp.any(jnp.isnan(out))
    assert jnp.allclose(out, ref, atol=2e-2, rtol=2e-2), (
        float(jnp.max(jnp.abs(out - ref))))

    print("KERNEL_OK")
</pallas_src>

<mosaic_0001>
module attributes {stable_mosaic.version = 11 : i64} {
  func.func @gat_kernel(%arg0: i32, %arg1: i32, %arg2: memref<64x1xf32, #tpu.memory_space<vmem>>, %arg3: memref<1x128xf32, #tpu.memory_space<vmem>>, %arg4: memref<128x8xbf16, #tpu.memory_space<vmem>>, %arg5: memref<64x128xi8, #tpu.memory_space<vmem>>, %arg6: memref<64x8xf32, #tpu.memory_space<vmem>>, %arg7: memref<64x1xf32, #tpu.memory_space<vmem>>, %arg8: memref<64x1xf32, #tpu.memory_space<vmem>>, %arg9: memref<64x8xf32, #tpu.memory_space<vmem>>) attributes {dimension_semantics = [#tpu.dimension_semantics<parallel>, #tpu.dimension_semantics<arbitrary>], iteration_bounds = array<i64: 4, 2>, scalar_prefetch = 0 : i64, scratch_operands = 3 : i64, tpu.core_type = #tpu.core_type<tc>, window_params = [{transform_indices = @transform_0, window_bounds = array<i64: 64, 1>}, {transform_indices = @transform_1, window_bounds = array<i64: 1, 128>}, {transform_indices = @transform_2, window_bounds = array<i64: 128, 8>}, {transform_indices = @transform_3, window_bounds = array<i64: 64, 128>}, {transform_indices = @transform_4, window_bounds = array<i64: 64, 8>}]} {
    %c0_i32 = arith.constant 0 : i32
    %0 = arith.cmpi eq, %arg1, %c0_i32 : i32
    %1 = arith.extui %0 : i1 to i32
    %c0_i32_0 = arith.constant 0 : i32
    %2 = arith.cmpi ne, %1, %c0_i32_0 : i32
    scf.if %2 {
      %cst_26 = arith.constant -1.000000e+20 : f32
      %45 = vector.broadcast %cst_26 : f32 to vector<64x1xf32>
      %c0_27 = arith.constant 0 : index
      %c0_28 = arith.constant 0 : index
      %46 = vector.load %arg7[%c0_27, %c0_28] : memref<64x1xf32, #tpu.memory_space<vmem>>, vector<64x1xf32>
      tpu.vector_store %arg7[%c0_27, %c0_28], %45 {strides = array<i32>} : memref<64x1xf32, #tpu.memory_space<vmem>>, vector<64x1xf32>,
      %cst_29 = arith.constant 0.000000e+00 : f32
      %47 = vector.broadcast %cst_29 : f32 to vector<64x1xf32>
      %c0_30 = arith.constant 0 : index
      %c0_31 = arith.constant 0 : index
      %48 = vector.load %arg8[%c0_30, %c0_31] : memref<64x1xf32, #tpu.memory_space<vmem>>, vector<64x1xf32>
      tpu.vector_store %arg8[%c0_30, %c0_31], %47 {strides = array<i32>} : memref<64x1xf32, #tpu.memory_space<vmem>>, vector<64x1xf32>,
      %cst_32 = arith.constant 0.000000e+00 : f32
      %49 = vector.broadcast %cst_32 : f32 to vector<64x8xf32>
      %c0_33 = arith.constant 0 : index
      %c0_34 = arith.constant 0 : index
      %50 = vector.load %arg9[%c0_33, %c0_34] : memref<64x8xf32, #tpu.memory_space<vmem>>, vector<64x8xf32>
      tpu.vector_store %arg9[%c0_33, %c0_34], %49 {strides = array<i32>} : memref<64x8xf32, #tpu.memory_space<vmem>>, vector<64x8xf32>,
    } else {
    }
    %c0 = arith.constant 0 : index
    %c0_1 = arith.constant 0 : index
    %3 = vector.load %arg2[%c0, %c0_1] : memref<64x1xf32, #tpu.memory_space<vmem>>, vector<64x1xf32>
    %c0_2 = arith.constant 0 : index
    %c0_3 = arith.constant 0 : index
    %4 = vector.load %arg3[%c0_2, %c0_3] : memref<1x128xf32, #tpu.memory_space<vmem>>, vector<1x128xf32>
    %5 = vector.broadcast %3 : vector<64x1xf32> to vector<64x128xf32>
    %6 = vector.broadcast %4 : vector<1x128xf32> to vector<64x128xf32>
    %7 = arith.addf %5, %6 : vector<64x128xf32>
    %cst = arith.constant 0.000000e+00 : f32
    %8 = vector.broadcast %cst : f32 to vector<64x128xf32>
    %9 = arith.cmpf ogt, %7, %8 : vector<64x128xf32>
    %cst_4 = arith.constant 0.00999999977 : f32
    %10 = vector.broadcast %cst_4 : f32 to vector<64x128xf32>
    %11 = arith.mulf %10, %7 : vector<64x128xf32>
    %12 = arith.select %9, %7, %11 : vector<64x128xi1>, vector<64x128xf32>
    %c0_5 = arith.constant 0 : index
    %c0_6 = arith.constant 0 : index
    %13 = vector.load %arg5[%c0_5, %c0_6] : memref<64x128xi8, #tpu.memory_space<vmem>>, vector<64x128xi8>
    %c0_i8 = arith.constant 0 : i8
    %14 = vector.broadcast %c0_i8 : i8 to vector<64x128xi8>
    %15 = arith.cmpi ne, %13, %14 : vector<64x128xi8>
    %cst_7 = arith.constant -1.000000e+30 : f32
    %16 = vector.broadcast %cst_7 : f32 to vector<64x128xf32>
    %17 = arith.select %15, %12, %16 : vector<64x128xi1>, vector<64x128xf32>
    %c0_8 = arith.constant 0 : index
    %c0_9 = arith.constant 0 : index
    %18 = vector.load %arg7[%c0_8, %c0_9] : memref<64x1xf32, #tpu.memory_space<vmem>>, vector<64x1xf32>
    %cst_10 = arith.constant dense<0xFF800000> : vector<64xf32>
    %19 = vector.multi_reduction <maximumf>, %17, %cst_10 [1] : vector<64x128xf32> to vector<64xf32>
    %20 = vector.shape_cast %19 : vector<64xf32> to vector<64x1xf32>
    %21 = arith.maximumf %18, %20 : vector<64x1xf32>
    %22 = arith.subf %18, %21 : vector<64x1xf32>
    %23 = math.exp %22 : vector<64x1xf32>
    %24 = vector.broadcast %21 : vector<64x1xf32> to vector<64x128xf32>
    %25 = arith.subf %17, %24 : vector<64x128xf32>
    %26 = math.exp %25 : vector<64x128xf32>
    %c0_11 = arith.constant 0 : index
    %c0_12 = arith.constant 0 : index
    %27 = vector.load %arg8[%c0_11, %c0_12] : memref<64x1xf32, #tpu.memory_space<vmem>>, vector<64x1xf32>
    %28 = arith.mulf %23, %27 : vector<64x1xf32>
    %cst_13 = arith.constant dense<0.000000e+00> : vector<64xf32>
    %29 = vector.multi_reduction <add>, %26, %cst_13 [1] : vector<64x128xf32> to vector<64xf32>
    %30 = vector.shape_cast %29 : vector<64xf32> to vector<64x1xf32>
    %31 = arith.addf %28, %30 : vector<64x1xf32>
    %c0_14 = arith.constant 0 : index
    %c0_15 = arith.constant 0 : index
    %32 = vector.load %arg8[%c0_14, %c0_15] : memref<64x1xf32, #tpu.memory_space<vmem>>, vector<64x1xf32>
    tpu.vector_store %arg8[%c0_14, %c0_15], %31 {strides = array<i32>} : memref<64x1xf32, #tpu.memory_space<vmem>>, vector<64x1xf32>,
    %c0_16 = arith.constant 0 : index
    %c0_17 = arith.constant 0 : index
    %33 = vector.load %arg9[%c0_16, %c0_17] : memref<64x8xf32, #tpu.memory_space<vmem>>, vector<64x8xf32>
    %34 = vector.broadcast %23 : vector<64x1xf32> to vector<64x8xf32>
    %35 = arith.mulf %34, %33 : vector<64x8xf32>
    %36 = arith.truncf %26 : vector<64x128xf32> to vector<64x128xbf16>
    %c0_18 = arith.constant 0 : index
    %c0_19 = arith.constant 0 : index
    %37 = vector.load %arg4[%c0_18, %c0_19] : memref<128x8xbf16, #tpu.memory_space<vmem>>, vector<128x8xbf16>
    %cst_20 = arith.constant dense<0.000000e+00> : vector<64x8xf32>
    %38 = tpu.matmul %36, %37, %cst_20 {dimension_numbers = #tpu.dot_dimension_numbers<[1], [0], [0], [1], [0, 0, 1, 1], [], []>} : vector<64x128xbf16>, vector<128x8xbf16>, vector<64x8xf32> -> vector<64x8xf32>
    %39 = arith.addf %35, %38 : vector<64x8xf32>
    %c0_21 = arith.constant 0 : index
    %c0_22 = arith.constant 0 : index
    %40 = vector.load %arg9[%c0_21, %c0_22] : memref<64x8xf32, #tpu.memory_space<vmem>>, vector<64x8xf32>
    tpu.vector_store %arg9[%c0_21, %c0_22], %39 {strides = array<i32>} : memref<64x8xf32, #tpu.memory_space<vmem>>, vector<64x8xf32>,
    %c0_23 = arith.constant 0 : index
    %c0_24 = arith.constant 0 : index
    %41 = vector.load %arg7[%c0_23, %c0_24] : memref<64x1xf32, #tpu.memory_space<vmem>>, vector<64x1xf32>
    tpu.vector_store %arg7[%c0_23, %c0_24], %21 {strides = array<i32>} : memref<64x1xf32, #tpu.memory_space<vmem>>, vector<64x1xf32>,
    %c1_i32 = arith.constant 1 : i32
    %42 = arith.cmpi eq, %arg1, %c1_i32 : i32
    %43 = arith.extui %42 : i1 to i32
    %c0_i32_25 = arith.constant 0 : i32
    %44 = arith.cmpi ne, %43, %c0_i32_25 : i32
    scf.if %44 {
      %c0_26 = arith.constant 0 : index
      %c0_27 = arith.constant 0 : index
      %45 = vector.load %arg8[%c0_26, %c0_27] : memref<64x1xf32, #tpu.memory_space<vmem>>, vector<64x1xf32>
      %46 = tpu.reciprocal %45 {approx = true} : vector<64x1xf32> -> vector<64x1xf32>
      %47 = arith.mulf %45, %46 : vector<64x1xf32>
      %cst_28 = arith.constant 2.000000e+00 : f32
      %48 = vector.broadcast %cst_28 : f32 to vector<64x1xf32>
      %49 = arith.subf %48, %47 : vector<64x1xf32>
      %50 = arith.mulf %46, %49 : vector<64x1xf32>
      %c0_29 = arith.constant 0 : index
      %c0_30 = arith.constant 0 : index
      %51 = vector.load %arg9[%c0_29, %c0_30] : memref<64x8xf32, #tpu.memory_space<vmem>>, vector<64x8xf32>
      %52 = vector.broadcast %50 : vector<64x1xf32> to vector<64x8xf32>
      %53 = arith.mulf %51, %52 : vector<64x8xf32>
      %c0_31 = arith.constant 0 : index
      %c0_32 = arith.constant 0 : index
      %54 = vector.load %arg6[%c0_31, %c0_32] : memref<64x8xf32, #tpu.memory_space<vmem>>, vector<64x8xf32>
      tpu.vector_store %arg6[%c0_31, %c0_32], %53 {strides = array<i32>} : memref<64x8xf32, #tpu.memory_space<vmem>>, vector<64x8xf32>,
    } else {
    }
    return
  }
  func.func @transform_0(%arg0: i32, %arg1: i32) -> (i32, i32) {
    %c0_i32 = arith.constant 0 : i32
    %c0_i32_0 = arith.constant 0 : i32
    return %arg0, %c0_i32 : i32, i32
  }
  func.func @transform_1(%arg0: i32, %arg1: i32) -> (i32, i32) {
    %c0_i32 = arith.constant 0 : i32
    %c0_i32_0 = arith.constant 0 : i32
    return %c0_i32, %arg1 : i32, i32
  }
  func.func @transform_2(%arg0: i32, %arg1: i32) -> (i32, i32) {
    %c0_i32 = arith.constant 0 : i32
    %c0_i32_0 = arith.constant 0 : i32
    return %arg1, %c0_i32 : i32, i32
  }
  func.func @transform_3(%arg0: i32, %arg1: i32) -> (i32, i32) {
    %c0_i32 = arith.constant 0 : i32
    return %arg0, %arg1 : i32, i32
  }
  func.func @transform_4(%arg0: i32, %arg1: i32) -> (i32, i32) {
    %c0_i32 = arith.constant 0 : i32
    %c0_i32_0 = arith.constant 0 : i32
    return %arg0, %c0_i32 : i32, i32
  }
}

</mosaic_0001>

<llo_original>
// kernel: tpu_custom_call.1
$region0: #{tpu_custom_call.1}
  #allocation0 [shape = 'u32[]', space=smem, size = 0x4, offset = 0x4, fixed_abs, tag = 'smem constant byte address 0x4 - core index']
  #allocation1 [shape = 'u32[72,128]{1,0:T(1,128)}', space=vmem, size = 0x9000, scoped, tag = 'internal scratch']
  #allocation2 [shape = 'f32[64,1]{1,0:T(8,128)}', space=vmem, size = 0x8000, scoped, tag = 'scratch operand']
  #allocation3 [shape = 'f32[64,1]{1,0:T(8,128)}', space=vmem, size = 0x8000, scoped, tag = 'scratch operand']
  #allocation4 [shape = 'f32[64,8]{1,0:T(8,128)}', space=vmem, size = 0x8000, scoped, tag = 'scratch operand']
  %s0 = inlined_call_operand.vmem [shape: f32[256,1], index: 0, kind: input, shape index: {}]
  %s1 = inlined_call_operand.vmem [shape: f32[1,256], index: 1, kind: input, shape index: {}]
  %s2 = inlined_call_operand.vmem [shape: bf16[256,8], index: 2, kind: input, shape index: {}]
  %s3 = inlined_call_operand.vmem [shape: s8[256,256], index: 3, kind: input, shape index: {}]
  %s4 = inlined_call_operand.vmem [shape: f32[256,8], index: 4, kind: output, shape index: {}]
  %s5 = sld [smem:[#allocation0]]
  $region95: #{tpu_custom_call.1} parent=0
    _
  %s7 = ssub.s32 1, %s5
  %s8 = scalar_select 0, %s7, %s5
  $region1: #{tpu_custom_call.1} parent=0
    #allocation5 [shape = 'u8[16384]{0}', space=vmem, size = 0x4000, scoped, tag = 'input window, operand 3']
    loop: start=0, step=1, limit=10
    $region2: #{tpu_custom_call.1} parent=1 // loop_pre_header
      _
    $region3: #{tpu_custom_call.1} parent=1 // loop_header
      %s10 = sphi 0, %s14
      %p11 = scmp.ge.s32.totalorder %s10, 10
      %s17 = sphi 0, %s29
      %s18 = sphi 0, %s25
      %s19 = sphi 0, %s17
      %s20 = sphi 0, %s18
      %s21 = sphi 0, %s19
      %s22 = sphi 0, %s20
      %s32 = sphi 0, %s34
      %s35 = sphi 0, %s32
      %s36 = sphi 0, %s35
      %s52 = sphi 0, %s36
      %s58 = sphi 0, %s60
      %s61 = sphi 0, %s58
      %s62 = sphi 0, %s61
      %s78 = sphi 0, %s62
      %s84 = sphi 0, %s86
      %s87 = sphi 0, %s84
      %s88 = sphi 0, %s87
      %s104 = sphi 0, %s88
      %s112 = sphi 0, %s114
      %s115 = sphi 0, %s112
      %s116 = sphi 0, %s115
      %s132 = sphi 0, %s116
      %s138 = sphi 0, %s140
      %s141 = sphi 0, %s138
      %s142 = sphi 0, %s141
      %s158 = sphi 0, %s142
    $region4: #{tpu_custom_call.1} parent=1 // loop_header_branch
      %13 = sbr.rel (%p11) target = $region8
    $region5: #{tpu_custom_call.1} parent=1 // loop_body
      %s15 = ssub.s32 %s10, 1
      %s16 = ssub.s32 %s10, 2
      %s23 = sadd.s32 1, %s18
      %p24 = scmp.ge.s32.totalorder %s23, 2
      %s25 = scalar_select %p24, 0, %s23
      %s26 = sadd.s32 1, %s17
      %s27 = scalar_select %p24, %s26, %s17
      %p28 = scmp.ge.s32.totalorder %s27, 4
      %s29 = scalar_select %p28, 0, %s27
      %s30 = ssub.s32 %s17, %s29
      %p31 = scmp.eq.s32.totalorder %s30, 0
      %s33 = sadd.s32 %s32, 1
      %s34 = scalar_select %p31, %s32, %s33
      %p37 = pneg %p31
      %p38 = scmp.eq.s32.totalorder %s10, 7
      %p39 = por %p37, %p38
      %p40 = scmp.ne.s32.totalorder %s32, %s35
      %p41 = scmp.eq.s32.totalorder %s10, 0
      %p42 = por %p40, %p41
      %p43 = scmp.ne.s32.totalorder %s32, %s35
      %p44 = scmp.eq.s32.totalorder %s15, 7
      %p45 = por %p43, %p44
      %p46 = scmp.ne.s32.totalorder %s35, %s36
      %p47 = scmp.eq.s32.totalorder %s15, 0
      %p48 = por %p46, %p47
      %p49 = scmp.ne.s32.totalorder %s35, %s36
      %p50 = scmp.eq.s32.totalorder %s16, 7
      %p51 = por %p49, %p50
      %p53 = scmp.ne.s32.totalorder %s36, %s52
      %p54 = scmp.eq.s32.totalorder %s16, 0
      %p55 = por %p53, %p54
      %s56 = ssub.s32 %s18, %s25
      %p57 = scmp.eq.s32.totalorder %s56, 0
      %s59 = sadd.s32 %s58, 1
      %s60 = scalar_select %p57, %s58, %s59
      %p63 = pneg %p57
      %p64 = scmp.eq.s32.totalorder %s10, 7
      %p65 = por %p63, %p64
      %p66 = scmp.ne.s32.totalorder %s58, %s61
      %p67 = scmp.eq.s32.totalorder %s10, 0
      %p68 = por %p66, %p67
      %p69 = scmp.ne.s32.totalorder %s58, %s61
      %p70 = scmp.eq.s32.totalorder %s15, 7
      %p71 = por %p69, %p70
      %p72 = scmp.ne.s32.totalorder %s61, %s62
      %p73 = scmp.eq.s32.totalorder %s15, 0
      %p74 = por %p72, %p73
      %p75 = scmp.ne.s32.totalorder %s61, %s62
      %p76 = scmp.eq.s32.totalorder %s16, 7
      %p77 = por %p75, %p76
      %p79 = scmp.ne.s32.totalorder %s62, %s78
      %p80 = scmp.eq.s32.totalorder %s16, 0
      %p81 = por %p79, %p80
      %s82 = ssub.s32 %s18, %s25
      %p83 = scmp.eq.s32.totalorder %s82, 0
      %s85 = sadd.s32 %s84, 1
      %s86 = scalar_select %p83, %s84, %s85
      %p89 = pneg %p83
      %p90 = scmp.eq.s32.totalorder %s10, 7
      %p91 = por %p89, %p90
      %p92 = scmp.ne.s32.totalorder %s84, %s87
      %p93 = scmp.eq.s32.totalorder %s10, 0
      %p94 = por %p92, %p93
      %p95 = scmp.ne.s32.totalorder %s84, %s87
      %p96 = scmp.eq.s32.totalorder %s15, 7
      %p97 = por %p95, %p96
      %p98 = scmp.ne.s32.totalorder %s87, %s88
      %p99 = scmp.eq.s32.totalorder %s15, 0
      %p100 = por %p98, %p99
      %p101 = scmp.ne.s32.totalorder %s87, %s88
      %p102 = scmp.eq.s32.totalorder %s16, 7
      %p103 = por %p101, %p102
      %p105 = scmp.ne.s32.totalorder %s88, %s104
      %p106 = scmp.eq.s32.totalorder %s16, 0
      %p107 = por %p105, %p106
      %s108 = ssub.s32 %s17, %s29
      %s109 = ssub.s32 %s18, %s25
      %s110 = sor.u32 %s108, %s109
      %p111 = scmp.eq.s32.totalorder %s110, 0
      %s113 = sadd.s32 %s112, 1
      %s114 = scalar_select %p111, %s112, %s113
      %p117 = pneg %p111
      %p118 = scmp.eq.s32.totalorder %s10, 7
      %p119 = por %p117, %p118
      %p120 = scmp.ne.s32.totalorder %s112, %s115
      %p121 = scmp.eq.s32.totalorder %s10, 0
      %p122 = por %p120, %p121
      %p123 = scmp.ne.s32.totalorder %s112, %s115
      %p124 = scmp.eq.s32.totalorder %s15, 7
      %p125 = por %p123, %p124
      %p126 = scmp.ne.s32.totalorder %s115, %s116
      %p127 = scmp.eq.s32.totalorder %s15, 0
      %p128 = por %p126, %p127
      %p129 = scmp.ne.s32.totalorder %s115, %s116
      %p130 = scmp.eq.s32.totalorder %s16, 7
      %p131 = por %p129, %p130
      %p133 = scmp.ne.s32.totalorder %s116, %s132
      %p134 = scmp.eq.s32.totalorder %s16, 0
      %p135 = por %p133, %p134
      %s136 = ssub.s32 %s17, %s29
      %p137 = scmp.eq.s32.totalorder %s136, 0
      %s139 = sadd.s32 %s138, 1
      %s140 = scalar_select %p137, %s138, %s139
      %p143 = pneg %p137
      %p144 = scmp.eq.s32.totalorder %s10, 7
      %p145 = por %p143, %p144
      %p146 = scmp.ne.s32.totalorder %s138, %s141
      %p147 = scmp.eq.s32.totalorder %s10, 0
      %p148 = por %p146, %p147
      %p149 = scmp.ne.s32.totalorder %s138, %s141
      %p150 = scmp.eq.s32.totalorder %s15, 7
      %p151 = por %p149, %p150
      %p152 = scmp.ne.s32.totalorder %s141, %s142
      %p153 = scmp.eq.s32.totalorder %s15, 0
      %p154 = por %p152, %p153
      %p155 = scmp.ne.s32.totalorder %s141, %s142
      %p156 = scmp.eq.s32.totalorder %s16, 7
      %p157 = por %p155, %p156
      %p159 = scmp.ne.s32.totalorder %s142, %s158
      %p160 = scmp.eq.s32.totalorder %s16, 0
      %p161 = por %p159, %p160
      %p162 = scmp.le.s32.totalorder 1, %s10
      %p163 = scmp.lt.s32.totalorder %s10, 9
      %p164 = pnand %p162, %p163
      %p165 = pneg %p164
      // Predicated region
      $region9: #{tpu_custom_call.1} parent=5 // pred_check
        _
      $region10: #{tpu_custom_call.1} parent=5 // pred_check_branch
        %167 = sbr.rel (%p164) target = $region12
      $region11: #{tpu_custom_call.1} parent=5 // pred_region
        %s168 = ssub.s32 %s10, 1
      $region12: #{tpu_custom_call.1} parent=5 // pred_fallthru
        _
      %p169 = scmp.lt.s32.totalorder %s10, 8
      // Predicated region
      $region13: #{tpu_custom_call.1} parent=5 // pred_check
        %p170 = pneg %p169
      $region14: #{tpu_custom_call.1} parent=5 // pred_check_branch
        %172 = sbr.rel (%p170) target = $region16
      $region15: #{tpu_custom_call.1} parent=5 // pred_region
        // Predicated region
        $region17: #{tpu_custom_call.1} parent=15 // pred_check
          %p173 = pneg %p42
        $region18: #{tpu_custom_call.1} parent=15 // pred_check_branch
          %175 = sbr.rel (%p173) target = $region20
        $region19: #{tpu_custom_call.1} parent=15 // pred_region
          %s176 = smul.u32 8, %s17
          %p177 = scmp.lt.s32.totalorder %s176, 31
          %s178 = scalar_select %p177, %s176, 31
          %s179 = smul.addr %s178, 8
          %s180 = scalar_lea.vmem %s0, %s179
          %s181 = smul.u32 8, %s17
        $region20: #{tpu_custom_call.1} parent=15 // pred_fallthru
          _
        // Predicated region
        $region21: #{tpu_custom_call.1} parent=15 // pred_check
          %p182 = pneg %p68
        $region22: #{tpu_custom_call.1} parent=15 // pred_check_branch
          %184 = sbr.rel (%p182) target = $region24
        $region23: #{tpu_custom_call.1} parent=15 // pred_region
          %p185 = scmp.lt.s32.totalorder %s18, 1
          %s186 = scalar_select %p185, %s18, 1
          %s187 = scalar_lea.vmem %s1, %s186
        $region24: #{tpu_custom_call.1} parent=15 // pred_fallthru
          _
        // Predicated region
        $region25: #{tpu_custom_call.1} parent=15 // pred_check
          %p188 = pneg %p94
        $region26: #{tpu_custom_call.1} parent=15 // pred_check_branch
          %190 = sbr.rel (%p188) target = $region28
        $region27: #{tpu_custom_call.1} parent=15 // pred_region
          %s191 = smul.u32 16, %s18
          %p192 = scmp.lt.s32.totalorder %s191, 31
          %s193 = scalar_select %p192, %s191, 31
          %s194 = smul.addr %s193, 4
          %s195 = scalar_lea.vmem %s2, %s194
          %s196 = smul.u32 16, %s18
        $region28: #{tpu_custom_call.1} parent=15 // pred_fallthru
          _
        // Predicated region
        $region29: #{tpu_custom_call.1} parent=15 // pred_check
          %p197 = pneg %p122
        $region30: #{tpu_custom_call.1} parent=15 // pred_check_branch
          %199 = sbr.rel (%p197) target = $region32
        $region31: #{tpu_custom_call.1} parent=15 // pred_region
          %s200 = sand.u32 %s112, 1
          %s201 = sand.u32 %s112, 1
          %s202 = smul.addr %s201, 16
          %s203 = scalar_lea.vmem [#allocation5], %s202
          %s204 = smul.u32 2, %s17
          %s205 = smul.addr %s204, 2
          %s206 = sadd.s32 %s18, %s205
          %s207 = smul.addr %s206, 8
          %s208 = scalar_lea.vmem %s3, %s207
          // Predicated region
          $region33: #{tpu_custom_call.1} parent=31 // pred_check
            _
          $region34: #{tpu_custom_call.1} parent=31 // pred_check_branch
            %210 = sbr.rel (0) target = $region36
          $region35: #{tpu_custom_call.1} parent=31 // pred_region
            // Predicated region
            $region37: #{tpu_custom_call.1} parent=35 // pred_check
              _
            $region38: #{tpu_custom_call.1} parent=35 // pred_check_branch
              %212 = sbr.rel (0) target = $region40
            $region39: #{tpu_custom_call.1} parent=35 // pred_region
              // Predicated region
              $region52: #{tpu_custom_call.1} parent=39 // pred_check
                _
              $region53: #{tpu_custom_call.1} parent=39 // pred_check_branch
                %230 = sbr.rel (0) target = $region55
              $region54: #{tpu_custom_call.1} parent=39 // pred_region
                loop: start=0, step=1, limit=1
                $region56: #{tpu_custom_call.1} parent=54 // loop_pre_header
                  _
                $region57: #{tpu_custom_call.1} parent=54 // loop_header
                  %s232 = sphi 0, %s236
                  %p233 = scmp.ge.s32.totalorder %s232, 1
                  %s237 = sphi %s208, %s208
                  %s238 = sphi %s203, %s203
                $region58: #{tpu_custom_call.1} parent=54 // loop_header_branch
                  %235 = sbr.rel (%p233) target = $region62
                $region59: #{tpu_custom_call.1} parent=54 // loop_body
                  %v239 = vld [vmem:[%s237] sm:$0xff]
                  %240 = vst [vmem:[%s238] sm:$0xff] %v239
                  %v241 = vld [vmem:[%s237 + $0x10] sm:$0xff]
                  %242 = vst [vmem:[%s238 + $0x8] sm:$0xff] %v241
                $region60: #{tpu_custom_call.1} parent=54 // loop_footer
                  %s236 = sadd.s32 1, %s232
                $region61: #{tpu_custom_call.1} parent=54 // loop_footer_branch
                  %231 = sbr.rel target = $region57
                $region62: #{tpu_custom_call.1} parent=54 // loop_exit
                  _
              $region55: #{tpu_custom_call.1} parent=39 // pred_fallthru
                _
              // Predicated region
              $region63: #{tpu_custom_call.1} parent=39 // pred_check
                _
              $region64: #{tpu_custom_call.1} parent=39 // pred_check_branch
                %244 = sbr.rel target = $region66
              $region65: #{tpu_custom_call.1} parent=39 // pred_region
                _
              $region66: #{tpu_custom_call.1} parent=39 // pred_fallthru
                _
            $region40: #{tpu_custom_call.1} parent=35 // pred_fallthru
              _
            // Predicated region
            $region41: #{tpu_custom_call.1} parent=35 // pred_check
              _
            $region42: #{tpu_custom_call.1} parent=35 // pred_check_branch
              %214 = sbr.rel target = $region44
            $region43: #{tpu_custom_call.1} parent=35 // pred_region
              %s216 = ssub.s32 256, 1
              loop: start=0, step=1, limit=1
              $region45: #{tpu_custom_call.1} parent=43 // loop_pre_header
                _
              $region46: #{tpu_custom_call.1} parent=43 // loop_header
                %s218 = sphi 0, %s222
                %p219 = scmp.ge.s32.totalorder %s218, 1
                %s223 = sphi %s208, %s208
                %s224 = sphi %s203, %s203
              $region47: #{tpu_custom_call.1} parent=43 // loop_header_branch
                %221 = sbr.rel (%p219) target = $region51
              $region48: #{tpu_custom_call.1} parent=43 // loop_body
                %v225 = vld [vmem:[%s223] sm:%s216]
                %226 = vst [vmem:[%s224] sm:%s216] %v225
                %v227 = vld [vmem:[%s223 + $0x10] sm:%s216]
                %228 = vst [vmem:[%s224 + $0x8] sm:%s216] %v227
              $region49: #{tpu_custom_call.1} parent=43 // loop_footer
                %s222 = sadd.s32 1, %s218
              $region50: #{tpu_custom_call.1} parent=43 // loop_footer_branch
                %217 = sbr.rel target = $region46
              $region51: #{tpu_custom_call.1} parent=43 // loop_exit
                _
            $region44: #{tpu_custom_call.1} parent=35 // pred_fallthru
              _
          $region36: #{tpu_custom_call.1} parent=31 // pred_fallthru
            _
          %245 = vnop
        $region32: #{tpu_custom_call.1} parent=15 // pred_fallthru
          _
      $region16: #{tpu_custom_call.1} parent=5 // pred_fallthru
        _
      %p246 = scmp.le.s32.totalorder 1, %s10
      %p247 = scmp.lt.s32.totalorder %s10, 9
      %p248 = pnand %p246, %p247
      %p249 = pneg %p248
      // Predicated region
      $region67: #{tpu_custom_call.1} parent=5 // pred_check
        _
      $region68: #{tpu_custom_call.1} parent=5 // pred_check_branch
        %251 = sbr.rel (%p248) target = $region70
      $region69: #{tpu_custom_call.1} parent=5 // pred_region
        %s252 = ssub.s32 %s10, 1
        %s253 = sand.u32 %s115, 1
        %s254 = sand.u32 %s115, 1
        %s255 = smul.addr %s254, 16
        %s256 = scalar_lea.vmem [#allocation5], %s255
        // Predicated region
        $region71: #{tpu_custom_call.1} parent=69 // pred_check
          %p257 = pneg %p128
        $region72: #{tpu_custom_call.1} parent=69 // pred_check_branch
          %259 = sbr.rel (%p257) target = $region74
        $region73: #{tpu_custom_call.1} parent=69 // pred_region
          _
        $region74: #{tpu_custom_call.1} parent=69 // pred_fallthru
          _
        %s260 = smul.u32 8, %s19
        %p261 = scmp.lt.s32.totalorder %s260, 31
        %s262 = scalar_select %p261, %s260, 31
        %s263 = smul.addr %s262, 8
        %s264 = scalar_lea.vmem %s0, %s263
        %p265 = pneg %p48
        %p266 = pneg %p45
        %p267 = scmp.lt.s32.totalorder %s20, 1
        %s268 = scalar_select %p267, %s20, 1
        %s269 = scalar_lea.vmem %s1, %s268
        %p270 = pneg %p74
        %p271 = pneg %p71
        %s272 = smul.u32 16, %s20
        %p273 = scmp.lt.s32.totalorder %s272, 31
        %s274 = scalar_select %p273, %s272, 31
        %s275 = smul.addr %s274, 4
        %s276 = scalar_lea.vmem %s2, %s275
        %p277 = pneg %p100
        %p278 = pneg %p97
        %s279 = sand.u32 %s115, 1
        %s280 = sand.u32 %s115, 1
        %s281 = smul.addr %s280, 16
        %s282 = scalar_lea.vmem [#allocation5], %s281
        %p283 = pneg %p128
        %p284 = pneg %p125
        %p285 = pneg %p154
        %p286 = pneg %p151
        %s287 = smul.u32 8, %s19
        %p288 = scmp.lt.s32.totalorder %s287, 31
        %s289 = scalar_select %p288, %s287, 31
        %s290 = smul.addr %s289, 8
        %s291 = scalar_lea.vmem %s4, %s290
        %s292 = smul.u32 8, %s19
        %p293 = scmp.lt.s32.totalorder %s292, 31
        %s294 = scalar_select %p293, %s292, 31
        %s295 = smul.addr %s294, 8
        %s296 = scalar_lea.vmem %s0, %s295
        %s297 = smul.u32 8, %s19
        %p298 = scmp.lt.s32.totalorder %s20, 1
        %s299 = scalar_select %p298, %s20, 1
        %s300 = scalar_lea.vmem %s1, %s299
        %s301 = smul.u32 16, %s20
        %p302 = scmp.lt.s32.totalorder %s301, 31
        %s303 = scalar_select %p302, %s301, 31
        %s304 = smul.addr %s303, 4
        %s305 = scalar_lea.vmem %s2, %s304
        %s306 = smul.u32 16, %s20
        %s307 = smul.u32 2, %s19
        %s308 = smul.u32 8, %s19
        %p309 = scmp.lt.s32.totalorder %s308, 31
        %s310 = scalar_select %p309, %s308, 31
        %s311 = smul.addr %s310, 8
        %s312 = scalar_lea.vmem %s4, %s311
        %s313 = smul.u32 8, %s19
        %p316 = scmp.eq.s32.totalorder %s20, 0
        // Predicated region
        $region75: #{tpu_custom_call.1} parent=69 // pred_check
          %p317 = pneg %p316
        $region76: #{tpu_custom_call.1} parent=69 // pred_check_branch
          %319 = sbr.rel (%p317) target = $region78
        $region77: #{tpu_custom_call.1} parent=69 // pred_region
          %vm320 = vcmask 7168
          %321 = vst.msk [vmem:[#allocation2] sm:$0xff] %vm320, -1e+20
          %322 = vst.msk [vmem:[#allocation2 + $0x8] sm:$0xff] %vm320, -1e+20
          %323 = vst.msk [vmem:[#allocation2 + $0x10] sm:$0xff] %vm320, -1e+20
          %324 = vst.msk [vmem:[#allocation2 + $0x18] sm:$0xff] %vm320, -1e+20
          %325 = vst.msk [vmem:[#allocation2 + $0x20] sm:$0xff] %vm320, -1e+20
          %326 = vst.msk [vmem:[#allocation2 + $0x28] sm:$0xff] %vm320, -1e+20
          %327 = vst.msk [vmem:[#allocation2 + $0x30] sm:$0xff] %vm320, -1e+20
          %328 = vst.msk [vmem:[#allocation2 + $0x38] sm:$0xff] %vm320, -1e+20
          %329 = vst.msk [vmem:[#allocation3] sm:$0xff] %vm320, 0.0
          %330 = vst.msk [vmem:[#allocation3 + $0x8] sm:$0xff] %vm320, 0.0
          %331 = vst.msk [vmem:[#allocation3 + $0x10] sm:$0xff] %vm320, 0.0
          %332 = vst.msk [vmem:[#allocation3 + $0x18] sm:$0xff] %vm320, 0.0
          %333 = vst.msk [vmem:[#allocation3 + $0x20] sm:$0xff] %vm320, 0.0
          %334 = vst.msk [vmem:[#allocation3 + $0x28] sm:$0xff] %vm320, 0.0
          %335 = vst.msk [vmem:[#allocation3 + $0x30] sm:$0xff] %vm320, 0.0
          %336 = vst.msk [vmem:[#allocation3 + $0x38] sm:$0xff] %vm320, 0.0
          %vm337 = vcmask 64512
          %338 = vst.msk [vmem:[#allocation4] sm:$0xff] %vm337, 0.0
          %339 = vst.msk [vmem:[#allocation4 + $0x8] sm:$0xff] %vm337, 0.0
          %340 = vst.msk [vmem:[#allocation4 + $0x10] sm:$0xff] %vm337, 0.0
          %341 = vst.msk [vmem:[#allocation4 + $0x18] sm:$0xff] %vm337, 0.0
          %342 = vst.msk [vmem:[#allocation4 + $0x20] sm:$0xff] %vm337, 0.0
          %343 = vst.msk [vmem:[#allocation4 + $0x28] sm:$0xff] %vm337, 0.0
          %344 = vst.msk [vmem:[#allocation4 + $0x30] sm:$0xff] %vm337, 0.0
          %345 = vst.msk [vmem:[#allocation4 + $0x38] sm:$0xff] %vm337, 0.0
        $region78: #{tpu_custom_call.1} parent=69 // pred_fallthru
          _
        %v346 = vld [vmem:[%s296] sm:$0xff]
        %v347 = vld [vmem:[%s296 + $0x8] sm:$0xff]
        %v348 = vld [vmem:[%s296 + $0x10] sm:$0xff]
        %v349 = vld [vmem:[%s296 + $0x18] sm:$0xff]
        %v350 = vld [vmem:[%s296 + $0x20] sm:$0xff]
        %v351 = vld [vmem:[%s296 + $0x28] sm:$0xff]
        %v352 = vld [vmem:[%s296 + $0x30] sm:$0xff]
        %v353 = vld [vmem:[%s296 + $0x38] sm:$0xff]
        %v354 = vld [vmem:[%s300] sm:$0x1]
        %356 = vset.pattern.permute.xlu0 0
        %357 = vperm.xlu0 %356, %v346
        %v358 = vpop.permute.xlu0 %357
        %361 = vset.pattern.permute.xlu0 0
        %362 = vperm.xlu0 %361, %v347
        %v363 = vpop.permute.xlu0 %362
        %366 = vset.pattern.permute.xlu0 0
        %367 = vperm.xlu0 %366, %v348
        %v368 = vpop.permute.xlu0 %367
        %371 = vset.pattern.permute.xlu0 0
        %372 = vperm.xlu0 %371, %v349
        %v373 = vpop.permute.xlu0 %372
        %376 = vset.pattern.permute.xlu0 0
        %377 = vperm.xlu0 %376, %v350
        %v378 = vpop.permute.xlu0 %377
        %381 = vset.pattern.permute.xlu0 0
        %382 = vperm.xlu0 %381, %v351
        %v383 = vpop.permute.xlu0 %382
        %386 = vset.pattern.permute.xlu0 0
        %387 = vperm.xlu0 %386, %v352
        %v388 = vpop.permute.xlu0 %387
        %391 = vset.pattern.permute.xlu0 0
        %392 = vperm.xlu0 %391, %v353
        %v393 = vpop.permute.xlu0 %392
        %v396 = vperm.slane %v354, 0
        %v398 = vadd.f32 %v358, %v396
        %v399 = vadd.f32 %v363, %v396
        %v400 = vadd.f32 %v368, %v396
        %v401 = vadd.f32 %v373, %v396
        %v402 = vadd.f32 %v378, %v396
        %v403 = vadd.f32 %v383, %v396
        %v404 = vadd.f32 %v388, %v396
        %v405 = vadd.f32 %v393, %v396
        %vm406 = vcmp.gt.f32.partialorder %v398, 0.0
        %vm407 = vcmp.gt.f32.partialorder %v399, 0.0
        %vm408 = vcmp.gt.f32.partialorder %v400, 0.0
        %vm409 = vcmp.gt.f32.partialorder %v401, 0.0
        %vm410 = vcmp.gt.f32.partialorder %v402, 0.0
        %vm411 = vcmp.gt.f32.partialorder %v403, 0.0
        %vm412 = vcmp.gt.f32.partialorder %v404, 0.0
        %vm413 = vcmp.gt.f32.partialorder %v405, 0.0
        %v414 = vmul.f32 %v398, 0.01
        %v415 = vmul.f32 %v399, 0.01
        %v416 = vmul.f32 %v400, 0.01
        %v417 = vmul.f32 %v401, 0.01
        %v418 = vmul.f32 %v402, 0.01
        %v419 = vmul.f32 %v403, 0.01
        %v420 = vmul.f32 %v404, 0.01
        %v421 = vmul.f32 %v405, 0.01
        %v422 = vsel %vm406, %v398, %v414
        %v423 = vsel %vm407, %v399, %v415
        %v424 = vsel %vm408, %v400, %v416
        %v425 = vsel %vm409, %v401, %v417
        %v426 = vsel %vm410, %v402, %v418
        %v427 = vsel %vm411, %v403, %v419
        %v428 = vsel %vm412, %v404, %v420
        %v429 = vsel %vm413, %v405, %v421
        %v430 = vld [vmem:[%s256] sm:$0xff]
        %v431 = vld [vmem:[%s256 + $0x8] sm:$0xff]
        %vm432 = vnez %v430
        %vm433 = vnez %v431
        %v434 = vsel %vm432, 16843009, 0
        %v435 = vsel %vm433, 16843009, 0
        %v436 = vunpack.c.0.s8 %v434
        %v437 = vunpack.c.1.s8 %v434
        %v438 = vunpack.c.2.s8 %v434
        %v439 = vunpack.c.3.s8 %v434
        %v440 = vunpack.c.0.s8 %v435
        %v441 = vunpack.c.1.s8 %v435
        %v442 = vunpack.c.2.s8 %v435
        %v443 = vunpack.c.3.s8 %v435
        %v444 = vpack.c.b16 %v436, %v436
        %v445 = vpack.c.b8 %v444, %v444
        %v446 = vpack.c.b16 %v437, %v437
        %v447 = vpack.c.b8 %v446, %v446
        %v448 = vpack.c.b16 %v438, %v438
        %v449 = vpack.c.b8 %v448, %v448
        %v450 = vpack.c.b16 %v439, %v439
        %v451 = vpack.c.b8 %v450, %v450
        %v452 = vpack.c.b16 %v440, %v440
        %v453 = vpack.c.b8 %v452, %v452
        %v454 = vpack.c.b16 %v441, %v441
        %v455 = vpack.c.b8 %v454, %v454
        %v456 = vpack.c.b16 %v442, %v442
        %v457 = vpack.c.b8 %v456, %v456
        %v458 = vpack.c.b16 %v443, %v443
        %v459 = vpack.c.b8 %v458, %v458
        %vm460 = vnez %v445
        %vm461 = vnez %v447
        %vm462 = vnez %v449
        %vm463 = vnez %v451
        %vm464 = vnez %v453
        %vm465 = vnez %v455
        %vm466 = vnez %v457
        %vm467 = vnez %v459
        %v468 = vsel %vm460, 16843009, 0
        %v469 = vsel %vm461, 16843009, 0
        %v470 = vsel %vm462, 16843009, 0
        %v471 = vsel %vm463, 16843009, 0
        %v472 = vsel %vm464, 16843009, 0
        %v473 = vsel %vm465, 16843009, 0
        %v474 = vsel %vm466, 16843009, 0
        %v475 = vsel %vm467, 16843009, 0
        %v476 = vunpack.c.0.s8 %v468
        %v477 = vunpack.c.0.s8 %v469
        %v478 = vunpack.c.0.s8 %v470
        %v479 = vunpack.c.0.s8 %v471
        %v480 = vunpack.c.0.s8 %v472
        %v481 = vunpack.c.0.s8 %v473
        %v482 = vunpack.c.0.s8 %v474
        %v483 = vunpack.c.0.s8 %v475
        %vm484 = vcmp.ne.s32.totalorder %v476, 0
        %vm485 = vcmp.ne.s32.totalorder %v477, 0
        %vm486 = vcmp.ne.s32.totalorder %v478, 0
        %vm487 = vcmp.ne.s32.totalorder %v479, 0
        %vm488 = vcmp.ne.s32.totalorder %v480, 0
        %vm489 = vcmp.ne.s32.totalorder %v481, 0
        %vm490 = vcmp.ne.s32.totalorder %v482, 0
        %vm491 = vcmp.ne.s32.totalorder %v483, 0
        %v492 = vsel %vm484, %v422, -1e+30
        %v493 = vsel %vm485, %v423, -1e+30
        %v494 = vsel %vm486, %v424, -1e+30
        %v495 = vsel %vm487, %v425, -1e+30
        %v496 = vsel %vm488, %v426, -1e+30
        %v497 = vsel %vm489, %v427, -1e+30
        %v498 = vsel %vm490, %v428, -1e+30
        %v499 = vsel %vm491, %v429, -1e+30
        %v500 = vld [vmem:[#allocation2] sm:$0xff]
        %v501 = vld [vmem:[#allocation2 + $0x8] sm:$0xff]
        %v502 = vld [vmem:[#allocation2 + $0x10] sm:$0xff]
        %v503 = vld [vmem:[#allocation2 + $0x18] sm:$0xff]
        %v504 = vld [vmem:[#allocation2 + $0x20] sm:$0xff]
        %v505 = vld [vmem:[#allocation2 + $0x28] sm:$0xff]
        %v506 = vld [vmem:[#allocation2 + $0x30] sm:$0xff]
        %v507 = vld [vmem:[#allocation2 + $0x38] sm:$0xff]
        %508 = vmax.xlane.f32.xlu0 %v492
        %v509 = vpop.xlane.xlu0 %508
        %510 = vmax.xlane.f32.xlu0 %v493
        %v511 = vpop.xlane.xlu0 %510
        %512 = vmax.xlane.f32.xlu0 %v494
        %v513 = vpop.xlane.xlu0 %512
        %514 = vmax.xlane.f32.xlu0 %v495
        %v515 = vpop.xlane.xlu0 %514
        %516 = vmax.xlane.f32.xlu0 %v496
        %v517 = vpop.xlane.xlu0 %516
        %518 = vmax.xlane.f32.xlu0 %v497
        %v519 = vpop.xlane.xlu0 %518
        %520 = vmax.xlane.f32.xlu0 %v498
        %v521 = vpop.xlane.xlu0 %520
        %522 = vmax.xlane.f32.xlu0 %v499
        %v523 = vpop.xlane.xlu0 %522
        %v524 = vmax.f32 %v500, %v509
        %v525 = vmax.f32 %v501, %v511
        %v526 = vmax.f32 %v502, %v513
        %v527 = vmax.f32 %v503, %v515
        %v528 = vmax.f32 %v504, %v517
        %v529 = vmax.f32 %v505, %v519
        %v530 = vmax.f32 %v506, %v521
        %v531 = vmax.f32 %v507, %v523
        %v532 = vsub.f32 %v500, %v524
        %v533 = vsub.f32 %v501, %v525
        %v534 = vsub.f32 %v502, %v526
        %v535 = vsub.f32 %v503, %v527
        %v536 = vsub.f32 %v504, %v528
        %v537 = vsub.f32 %v505, %v529
        %v538 = vsub.f32 %v506, %v530
        %v539 = vsub.f32 %v507, %v531
        %v540 = vmul.f32 %v532, 1.442695
        %v541 = vpow.pop %v540
        %v542 = vmul.f32 %v533, 1.442695
        %v543 = vpow.pop %v542
        %v544 = vmul.f32 %v534, 1.442695
        %v545 = vpow.pop %v544
        %v546 = vmul.f32 %v535, 1.442695
        %v547 = vpow.pop %v546
        %v548 = vmul.f32 %v536, 1.442695
        %v549 = vpow.pop %v548
        %v550 = vmul.f32 %v537, 1.442695
        %v551 = vpow.pop %v550
        %v552 = vmul.f32 %v538, 1.442695
        %v553 = vpow.pop %v552
        %v554 = vmul.f32 %v539, 1.442695
        %v555 = vpow.pop %v554
        %557 = vset.pattern.permute.xlu0 0
        %558 = vperm.xlu0 %557, %v524
        %v559 = vpop.permute.xlu0 %558
        %562 = vset.pattern.permute.xlu0 0
        %563 = vperm.xlu0 %562, %v525
        %v564 = vpop.permute.xlu0 %563
        %567 = vset.pattern.permute.xlu0 0
        %568 = vperm.xlu0 %567, %v526
        %v569 = vpop.permute.xlu0 %568
        %572 = vset.pattern.permute.xlu0 0
        %573 = vperm.xlu0 %572, %v527
        %v574 = vpop.permute.xlu0 %573
        %577 = vset.pattern.permute.xlu0 0
        %578 = vperm.xlu0 %577, %v528
        %v579 = vpop.permute.xlu0 %578
        %582 = vset.pattern.permute.xlu0 0
        %583 = vperm.xlu0 %582, %v529
        %v584 = vpop.permute.xlu0 %583
        %587 = vset.pattern.permute.xlu0 0
        %588 = vperm.xlu0 %587, %v530
        %v589 = vpop.permute.xlu0 %588
        %592 = vset.pattern.permute.xlu0 0
        %593 = vperm.xlu0 %592, %v531
        %v594 = vpop.permute.xlu0 %593
        %v596 = vsub.f32 %v492, %v559
        %v597 = vsub.f32 %v493, %v564
        %v598 = vsub.f32 %v494, %v569
        %v599 = vsub.f32 %v495, %v574
        %v600 = vsub.f32 %v496, %v579
        %v601 = vsub.f32 %v497, %v584
        %v602 = vsub.f32 %v498, %v589
        %v603 = vsub.f32 %v499, %v594
        %v604 = vmul.f32 %v596, 1.442695
        %v605 = vpow.pop %v604
        %v606 = vmul.f32 %v597, 1.442695
        %v607 = vpow.pop %v606
        %v608 = vmul.f32 %v598, 1.442695
        %v609 = vpow.pop %v608
        %v610 = vmul.f32 %v599, 1.442695
        %v611 = vpow.pop %v610
        %v612 = vmul.f32 %v600, 1.442695
        %v613 = vpow.pop %v612
        %v614 = vmul.f32 %v601, 1.442695
        %v615 = vpow.pop %v614
        %v616 = vmul.f32 %v602, 1.442695
        %v617 = vpow.pop %v616
        %v618 = vmul.f32 %v603, 1.442695
        %v619 = vpow.pop %v618
        %v620 = vld [vmem:[#allocation3] sm:$0xff]
        %v621 = vld [vmem:[#allocation3 + $0x8] sm:$0xff]
        %v622 = vld [vmem:[#allocation3 + $0x10] sm:$0xff]
        %v623 = vld [vmem:[#allocation3 + $0x18] sm:$0xff]
        %v624 = vld [vmem:[#allocation3 + $0x20] sm:$0xff]
        %v625 = vld [vmem:[#allocation3 + $0x28] sm:$0xff]
        %v626 = vld [vmem:[#allocation3 + $0x30] sm:$0xff]
        %v627 = vld [vmem:[#allocation3 + $0x38] sm:$0xff]
        %v628 = vmul.f32 %v541, %v620
        %v629 = vmul.f32 %v543, %v621
        %v630 = vmul.f32 %v545, %v622
        %v631 = vmul.f32 %v547, %v623
        %v632 = vmul.f32 %v549, %v624
        %v633 = vmul.f32 %v551, %v625
        %v634 = vmul.f32 %v553, %v626
        %v635 = vmul.f32 %v555, %v627
        %636 = vadd.xlane.f32.xlu0 %v605
        %v637 = vpop.xlane.xlu0 %636
        %638 = vadd.xlane.f32.xlu0 %v607
        %v639 = vpop.xlane.xlu0 %638
        %640 = vadd.xlane.f32.xlu0 %v609
        %v641 = vpop.xlane.xlu0 %640
        %642 = vadd.xlane.f32.xlu0 %v611
        %v643 = vpop.xlane.xlu0 %642
        %644 = vadd.xlane.f32.xlu0 %v613
        %v645 = vpop.xlane.xlu0 %644
        %646 = vadd.xlane.f32.xlu0 %v615
        %v647 = vpop.xlane.xlu0 %646
        %648 = vadd.xlane.f32.xlu0 %v617
        %v649 = vpop.xlane.xlu0 %648
        %650 = vadd.xlane.f32.xlu0 %v619
        %v651 = vpop.xlane.xlu0 %650
        %v652 = vadd.f32 %v628, %v637
        %v653 = vadd.f32 %v629, %v639
        %v654 = vadd.f32 %v630, %v641
        %v655 = vadd.f32 %v631, %v643
        %v656 = vadd.f32 %v632, %v645
        %v657 = vadd.f32 %v633, %v647
        %v658 = vadd.f32 %v634, %v649
        %v659 = vadd.f32 %v635, %v651
        %vm660 = vcmask 7168
        %661 = vst.msk [vmem:[#allocation3] sm:$0xff] %vm660, %v652
        %662 = vst.msk [vmem:[#allocation3 + $0x8] sm:$0xff] %vm660, %v653
        %663 = vst.msk [vmem:[#allocation3 + $0x10] sm:$0xff] %vm660, %v654
        %664 = vst.msk [vmem:[#allocation3 + $0x18] sm:$0xff] %vm660, %v655
        %665 = vst.msk [vmem:[#allocation3 + $0x20] sm:$0xff] %vm660, %v656
        %666 = vst.msk [vmem:[#allocation3 + $0x28] sm:$0xff] %vm660, %v657
        %667 = vst.msk [vmem:[#allocation3 + $0x30] sm:$0xff] %vm660, %v658
        %668 = vst.msk [vmem:[#allocation3 + $0x38] sm:$0xff] %vm660, %v659
        %v669 = vld [vmem:[#allocation4] sm:$0xff]
        %v670 = vld [vmem:[#allocation4 + $0x8] sm:$0xff]
        %v671 = vld [vmem:[#allocation4 + $0x10] sm:$0xff]
        %v672 = vld [vmem:[#allocation4 + $0x18] sm:$0xff]
        %v673 = vld [vmem:[#allocation4 + $0x20] sm:$0xff]
        %v674 = vld [vmem:[#allocation4 + $0x28] sm:$0xff]
        %v675 = vld [vmem:[#allocation4 + $0x30] sm:$0xff]
        %v676 = vld [vmem:[#allocation4 + $0x38] sm:$0xff]
        %678 = vset.pattern.permute.xlu0 0
        %679 = vperm.xlu0 %678, %v541
        %v680 = vpop.permute.xlu0 %679
        %683 = vset.pattern.permute.xlu0 0
        %684 = vperm.xlu0 %683, %v543
        %v685 = vpop.permute.xlu0 %684
        %688 = vset.pattern.permute.xlu0 0
        %689 = vperm.xlu0 %688, %v545
        %v690 = vpop.permute.xlu0 %689
        %693 = vset.pattern.permute.xlu0 0
        %694 = vperm.xlu0 %693, %v547
        %v695 = vpop.permute.xlu0 %694
        %698 = vset.pattern.permute.xlu0 0
        %699 = vperm.xlu0 %698, %v549
        %v700 = vpop.permute.xlu0 %699
        %703 = vset.pattern.permute.xlu0 0
        %704 = vperm.xlu0 %703, %v551
        %v705 = vpop.permute.xlu0 %704
        %708 = vset.pattern.permute.xlu0 0
        %709 = vperm.xlu0 %708, %v553
        %v710 = vpop.permute.xlu0 %709
        %713 = vset.pattern.permute.xlu0 0
        %714 = vperm.xlu0 %713, %v555
        %v715 = vpop.permute.xlu0 %714
        %v717 = vmul.f32 %v680, %v669
        %v718 = vmul.f32 %v685, %v670
        %v719 = vmul.f32 %v690, %v671
        %v720 = vmul.f32 %v695, %v672
        %v721 = vmul.f32 %v700, %v673
        %v722 = vmul.f32 %v705, %v674
        %v723 = vmul.f32 %v710, %v675
        %v724 = vmul.f32 %v715, %v676
        %v725 = vpack.c.bf16 %v607, %v605
        %v726 = vpack.c.bf16 %v611, %v609
        %v727 = vpack.c.bf16 %v615, %v613
        %v728 = vpack.c.bf16 %v619, %v617
        %v729 = vld [vmem:[%s305] sm:$0xf]
        %v730 = vld [vmem:[%s305 + $0x4] sm:$0xf]
        %v731 = vld [vmem:[%s305 + $0x8] sm:$0xf]
        %v732 = vld [vmem:[%s305 + $0xc] sm:$0xf]
        %v733 = vld [vmem:[%s305 + $0x10] sm:$0xf]
        %v734 = vld [vmem:[%s305 + $0x14] sm:$0xf]
        %v735 = vld [vmem:[%s305 + $0x18] sm:$0xf]
        %v736 = vld [vmem:[%s305 + $0x1c] sm:$0xf]
        %v737 = vld [vmem:[%s305 + $0x20] sm:$0xf]
        %v738 = vld [vmem:[%s305 + $0x24] sm:$0xf]
        %v739 = vld [vmem:[%s305 + $0x28] sm:$0xf]
        %v740 = vld [vmem:[%s305 + $0x2c] sm:$0xf]
        %v741 = vld [vmem:[%s305 + $0x30] sm:$0xf]
        %v742 = vld [vmem:[%s305 + $0x34] sm:$0xf]
        %v743 = vld [vmem:[%s305 + $0x38] sm:$0xf]
        %v744 = vld [vmem:[%s305 + $0x3c] sm:$0xf]
        %v761 = vunpack.c.l.b16 %v729
        %v762 = vunpack.c.l.b16 %v730
        %v763 = vunpack.c.l.b16 %v731
        %v764 = vunpack.c.l.b16 %v732
        %v765 = vunpack.c.l.b16 %v733
        %v766 = vunpack.c.l.b16 %v734
        %v767 = vunpack.c.l.b16 %v735
        %v768 = vunpack.c.l.b16 %v736
        %v769 = vunpack.c.l.b16 %v737
        %v770 = vunpack.c.l.b16 %v738
        %v771 = vunpack.c.l.b16 %v739
        %v772 = vunpack.c.l.b16 %v740
        %v773 = vunpack.c.l.b16 %v741
        %v774 = vunpack.c.l.b16 %v742
        %v775 = vunpack.c.l.b16 %v743
        %v776 = vunpack.c.l.b16 %v744
        %v777 = vpack.c.b16 %v762, %v761
        %v778 = vpack.c.b16 %v764, %v763
        %v779 = vpack.c.b16 %v766, %v765
        %v780 = vpack.c.b16 %v768, %v767
        %v781 = vpack.c.b16 %v770, %v769
        %v782 = vpack.c.b16 %v772, %v771
        %v783 = vpack.c.b16 %v774, %v773
        %v784 = vpack.c.b16 %v776, %v775
        %793 = vmatpush.bf16.msra.mxu0 %v784
        %794 = vmatpush.bf16.msra.mxu0 %v783
        %795 = vmatpush.bf16.msra.mxu0 %v782
        %796 = vmatpush.bf16.msra.mxu0 %v781
        %797 = vmatpush.bf16.msra.mxu0 %v780
        %798 = vmatpush.bf16.msra.mxu0 %v779
        %799 = vmatpush.bf16.msra.mxu0 %v778
        %800 = vmatpush.bf16.msra.mxu0 %v777
        %801 = vmatmul.bf16.gmra.mxu0 %v725
        %v802 = vpop.f32.mrf.mxu0
        %v803 = vadd.f32 0.0, %v802
        %v804 = vpop.f32.mrf.mxu0
        %v805 = vadd.f32 0.0, %v804
        %806 = vmatmul.bf16.gmra.mxu0 %v726
        %v807 = vpop.f32.mrf.mxu0
        %v808 = vadd.f32 0.0, %v807
        %v809 = vpop.f32.mrf.mxu0
        %v810 = vadd.f32 0.0, %v809
        %811 = vmatmul.bf16.gmra.mxu0 %v727
        %v812 = vpop.f32.mrf.mxu0
        %v813 = vadd.f32 0.0, %v812
        %v814 = vpop.f32.mrf.mxu0
        %v815 = vadd.f32 0.0, %v814
        %816 = vmatmul.bf16.gmra.mxu0 %v728
        %v817 = vpop.f32.mrf.mxu0
        %v818 = vadd.f32 0.0, %v817
        %v819 = vpop.f32.mrf.mxu0
        %v820 = vadd.f32 0.0, %v819
        %821 = vdwg.mxu0
        %v822 = vadd.f32 %v717, %v803
        %v823 = vadd.f32 %v718, %v805
        %v824 = vadd.f32 %v719, %v808
        %v825 = vadd.f32 %v720, %v810
        %v826 = vadd.f32 %v721, %v813
        %v827 = vadd.f32 %v722, %v815
        %v828 = vadd.f32 %v723, %v818
        %v829 = vadd.f32 %v724, %v820
        %vm830 = vcmask 64512
        %831 = vst.msk [vmem:[#allocation4] sm:$0xff] %vm830, %v822
        %832 = vst.msk [vmem:[#allocation4 + $0x8] sm:$0xff] %vm830, %v823
        %833 = vst.msk [vmem:[#allocation4 + $0x10] sm:$0xff] %vm830, %v824
        %834 = vst.msk [vmem:[#allocation4 + $0x18] sm:$0xff] %vm830, %v825
        %835 = vst.msk [vmem:[#allocation4 + $0x20] sm:$0xff] %vm830, %v826
        %836 = vst.msk [vmem:[#allocation4 + $0x28] sm:$0xff] %vm830, %v827
        %837 = vst.msk [vmem:[#allocation4 + $0x30] sm:$0xff] %vm830, %v828
        %838 = vst.msk [vmem:[#allocation4 + $0x38] sm:$0xff] %vm830, %v829
        %839 = vst.msk [vmem:[#allocation2] sm:$0xff] %vm660, %v524
        %840 = vst.msk [vmem:[#allocation2 + $0x8] sm:$0xff] %vm660, %v525
        %841 = vst.msk [vmem:[#allocation2 + $0x10] sm:$0xff] %vm660, %v526
        %842 = vst.msk [vmem:[#allocation2 + $0x18] sm:$0xff] %vm660, %v527
        %843 = vst.msk [vmem:[#allocation2 + $0x20] sm:$0xff] %vm660, %v528
        %844 = vst.msk [vmem:[#allocation2 + $0x28] sm:$0xff] %vm660, %v529
        %845 = vst.msk [vmem:[#allocation2 + $0x30] sm:$0xff] %vm660, %v530
        %846 = vst.msk [vmem:[#allocation2 + $0x38] sm:$0xff] %vm660, %v531
        %p847 = scmp.eq.s32.totalorder %s20, 1
        // Predicated region
        $region79: #{tpu_custom_call.1} parent=69 // pred_check
          %p848 = pneg %p847
        $region80: #{tpu_custom_call.1} parent=69 // pred_check_branch
          %850 = sbr.rel (%p848) target = $region82
        $region81: #{tpu_custom_call.1} parent=69 // pred_region
          %v851 = vld [vmem:[#allocation3] sm:$0xff]
          %v852 = vld [vmem:[#allocation3 + $0x8] sm:$0xff]
          %v853 = vld [vmem:[#allocation3 + $0x10] sm:$0xff]
          %v854 = vld [vmem:[#allocation3 + $0x18] sm:$0xff]
          %v855 = vld [vmem:[#allocation3 + $0x20] sm:$0xff]
          %v856 = vld [vmem:[#allocation3 + $0x28] sm:$0xff]
          %v857 = vld [vmem:[#allocation3 + $0x30] sm:$0xff]
          %v858 = vld [vmem:[#allocation3 + $0x38] sm:$0xff]
          %v859 = vrcp.pop %v851
          %v860 = vrcp.pop %v852
          %v861 = vrcp.pop %v853
          %v862 = vrcp.pop %v854
          %v863 = vrcp.pop %v855
          %v864 = vrcp.pop %v856
          %v865 = vrcp.pop %v857
          %v866 = vrcp.pop %v858
          %v867 = vmul.f32 %v851, %v859
          %v868 = vmul.f32 %v852, %v860
          %v869 = vmul.f32 %v853, %v861
          %v870 = vmul.f32 %v854, %v862
          %v871 = vmul.f32 %v855, %v863
          %v872 = vmul.f32 %v856, %v864
          %v873 = vmul.f32 %v857, %v865
          %v874 = vmul.f32 %v858, %v866
          %v875 = vsub.f32 2.0, %v867
          %v876 = vsub.f32 2.0, %v868
          %v877 = vsub.f32 2.0, %v869
          %v878 = vsub.f32 2.0, %v870
          %v879 = vsub.f32 2.0, %v871
          %v880 = vsub.f32 2.0, %v872
          %v881 = vsub.f32 2.0, %v873
          %v882 = vsub.f32 2.0, %v874
          %v883 = vmul.f32 %v859, %v875
          %v884 = vmul.f32 %v860, %v876
          %v885 = vmul.f32 %v861, %v877
          %v886 = vmul.f32 %v862, %v878
          %v887 = vmul.f32 %v863, %v879
          %v888 = vmul.f32 %v864, %v880
          %v889 = vmul.f32 %v865, %v881
          %v890 = vmul.f32 %v866, %v882
          %v891 = vld [vmem:[#allocation4] sm:$0xff]
          %v892 = vld [vmem:[#allocation4 + $0x8] sm:$0xff]
          %v893 = vld [vmem:[#allocation4 + $0x10] sm:$0xff]
          %v894 = vld [vmem:[#allocation4 + $0x18] sm:$0xff]
          %v895 = vld [vmem:[#allocation4 + $0x20] sm:$0xff]
          %v896 = vld [vmem:[#allocation4 + $0x28] sm:$0xff]
          %v897 = vld [vmem:[#allocation4 + $0x30] sm:$0xff]
          %v898 = vld [vmem:[#allocation4 + $0x38] sm:$0xff]
          %900 = vset.pattern.permute.xlu0 0
          %901 = vperm.xlu0 %900, %v883
          %v902 = vpop.permute.xlu0 %901
          %905 = vset.pattern.permute.xlu0 0
          %906 = vperm.xlu0 %905, %v884
          %v907 = vpop.permute.xlu0 %906
          %910 = vset.pattern.permute.xlu0 0
          %911 = vperm.xlu0 %910, %v885
          %v912 = vpop.permute.xlu0 %911
          %915 = vset.pattern.permute.xlu0 0
          %916 = vperm.xlu0 %915, %v886
          %v917 = vpop.permute.xlu0 %916
          %920 = vset.pattern.permute.xlu0 0
          %921 = vperm.xlu0 %920, %v887
          %v922 = vpop.permute.xlu0 %921
          %925 = vset.pattern.permute.xlu0 0
          %926 = vperm.xlu0 %925, %v888
          %v927 = vpop.permute.xlu0 %926
          %930 = vset.pattern.permute.xlu0 0
          %931 = vperm.xlu0 %930, %v889
          %v932 = vpop.permute.xlu0 %931
          %935 = vset.pattern.permute.xlu0 0
          %936 = vperm.xlu0 %935, %v890
          %v937 = vpop.permute.xlu0 %936
          %v939 = vmul.f32 %v891, %v902
          %v940 = vmul.f32 %v892, %v907
          %v941 = vmul.f32 %v893, %v912
          %v942 = vmul.f32 %v894, %v917
          %v943 = vmul.f32 %v895, %v922
          %v944 = vmul.f32 %v896, %v927
          %v945 = vmul.f32 %v897, %v932
          %v946 = vmul.f32 %v898, %v937
          %947 = vst.msk [vmem:[%s312] sm:$0xff] %vm830, %v939
          %948 = vst.msk [vmem:[%s312 + $0x8] sm:$0xff] %vm830, %v940
          %949 = vst.msk [vmem:[%s312 + $0x10] sm:$0xff] %vm830, %v941
          %950 = vst.msk [vmem:[%s312 + $0x18] sm:$0xff] %vm830, %v942
          %951 = vst.msk [vmem:[%s312 + $0x20] sm:$0xff] %vm830, %v943
          %952 = vst.msk [vmem:[%s312 + $0x28] sm:$0xff] %vm830, %v944
          %953 = vst.msk [vmem:[%s312 + $0x30] sm:$0xff] %vm830, %v945
          %954 = vst.msk [vmem:[%s312 + $0x38] sm:$0xff] %vm830, %v946
        $region82: #{tpu_custom_call.1} parent=69 // pred_fallthru
          _
        %s955 = smul.u32 8, %s19
        %p956 = scmp.lt.s32.totalorder %s955, 31
        %s957 = scalar_select %p956, %s955, 31
        %s958 = smul.addr %s957, 8
        %s959 = scalar_lea.vmem %s4, %s958
        // Predicated region
        $region83: #{tpu_custom_call.1} parent=69 // pred_check
          %p960 = pneg %p151
        $region84: #{tpu_custom_call.1} parent=69 // pred_check_branch
          %962 = sbr.rel (%p960) target = $region86
        $region85: #{tpu_custom_call.1} parent=69 // pred_region
          %s963 = smul.u32 8, %s19
        $region86: #{tpu_custom_call.1} parent=69 // pred_fallthru
          _
      $region70: #{tpu_custom_call.1} parent=5 // pred_fallthru
        _
      %p964 = scmp.le.s32.totalorder 2, %s10
      // Predicated region
      $region87: #{tpu_custom_call.1} parent=5 // pred_check
        %p965 = pneg %p964
      $region88: #{tpu_custom_call.1} parent=5 // pred_check_branch
        %967 = sbr.rel (%p965) target = $region90
      $region89: #{tpu_custom_call.1} parent=5 // pred_region
        %s968 = ssub.s32 %s10, 2
        // Predicated region
        $region91: #{tpu_custom_call.1} parent=89 // pred_check
          %p969 = pneg %p157
        $region92: #{tpu_custom_call.1} parent=89 // pred_check_branch
          %971 = sbr.rel (%p969) target = $region94
        $region93: #{tpu_custom_call.1} parent=89 // pred_region
          %s972 = smul.u32 8, %s21
          %p973 = scmp.lt.s32.totalorder %s972, 31
          %s974 = scalar_select %p973, %s972, 31
          %s975 = smul.addr %s974, 8
          %s976 = scalar_lea.vmem %s4, %s975
        $region94: #{tpu_custom_call.1} parent=89 // pred_fallthru
          _
      $region90: #{tpu_custom_call.1} parent=5 // pred_fallthru
        _
    $region6: #{tpu_custom_call.1} parent=1 // loop_footer
      %s14 = sadd.s32 1, %s10
    $region7: #{tpu_custom_call.1} parent=1 // loop_footer_branch
      %9 = sbr.rel target = $region3
    $region8: #{tpu_custom_call.1} parent=1 // loop_exit
      _

</llo_original>
